<compile_context>
chip_gen: v7x
topology: tpu7x:2x2x1
jax: 0.10.0
libtpu: 0.0.40
codegen_flags: <defaults>
</compile_context>

<pallas_src>
import jax
import jax.numpy as jnp
from jax.experimental import pallas as pl
from jax.experimental.pallas import tpu as pltpu


# ----------------------------------------------------------------------------
# Kernels
# ----------------------------------------------------------------------------
def _noisy_linear_train_kernel(x_ref, xn_ref, wmu_ref, wsig_ref, eout_ref, b_ref,
                               o_ref, acc_mu_ref, acc_sig_ref):
    """y = x@wmu + eps_out * ((x*eps_in)@wsig) + bias, accumulated over the K grid axis."""
    k = pl.program_id(2)

    @pl.when(k == 0)
    def _init():
        acc_mu_ref[...] = jnp.zeros_like(acc_mu_ref)
        acc_sig_ref[...] = jnp.zeros_like(acc_sig_ref)

    acc_mu_ref[...] += jnp.dot(x_ref[...], wmu_ref[...],
                               preferred_element_type=jnp.float32)
    acc_sig_ref[...] += jnp.dot(xn_ref[...], wsig_ref[...],
                                preferred_element_type=jnp.float32)

    @pl.when(k == pl.num_programs(2) - 1)
    def _finalize():
        # eps_out column scale, bias add: once per output tile, all in f32.
        o_ref[...] = (acc_mu_ref[...] + eout_ref[...] * acc_sig_ref[...]
                      + b_ref[...]).astype(o_ref.dtype)


def _noisy_linear_eval_kernel(x_ref, wmu_ref, b_ref, o_ref, acc_ref):
    k = pl.program_id(2)

    @pl.when(k == 0)
    def _init():
        acc_ref[...] = jnp.zeros_like(acc_ref)

    acc_ref[...] += jnp.dot(x_ref[...], wmu_ref[...],
                            preferred_element_type=jnp.float32)

    @pl.when(k == pl.num_programs(2) - 1)
    def _finalize():
        o_ref[...] = (acc_ref[...] + b_ref[...]).astype(o_ref.dtype)


# ----------------------------------------------------------------------------
# Tiling helpers
# ----------------------------------------------------------------------------
def _round_up(x, m):
    return ((x + m - 1) // m) * m


def _pick_tile(padded_dim, cap):
    """Largest multiple of 128 <= cap that divides padded_dim (padded_dim % 128 == 0)."""
    t = min(cap, padded_dim)
    t = max(128, (t // 128) * 128)
    while padded_dim % t != 0:
        t -= 128
    return t


def _pick_batch_tile(b_padded, cap):
    """Largest multiple of 8 <= cap that divides b_padded (b_padded % 8 == 0)."""
    t = min(cap, b_padded)
    t = max(8, (t // 8) * 8)
    while b_padded % t != 0:
        t -= 8
    return t


def _pad2(a, rows, cols):
    return jnp.pad(a, ((0, rows - a.shape[0]), (0, cols - a.shape[1])))


# ----------------------------------------------------------------------------
# One-time parameter preparation (pad + transpose + cast the weight matrices ONCE).
# ----------------------------------------------------------------------------
def prepare_noisy_linear(params, stream_dtype=jnp.bfloat16):
    wmu, wsig = params["weight_mu"], params["weight_sigma"]
    out_dim, in_dim = wmu.shape
    in_p = _round_up(in_dim, 128)
    out_p = _round_up(out_dim, 128)

    def pad_transpose_cast(w):
        w = jnp.pad(w, ((0, out_p - out_dim), (0, in_p - in_dim)))
        return jnp.asarray(w.T, dtype=stream_dtype)     # (in_p, out_p), K-major for MXU

    eps_out_row = _pad2(params["weight_eps_out"].reshape(1, out_dim),
                        1, out_p).astype(jnp.float32)

    return {
        "in_dim": in_dim, "out_dim": out_dim, "in_p": in_p, "out_p": out_p,
        "stream_dtype": stream_dtype,
        "wmu_t": pad_transpose_cast(wmu),
        "wsig_t": pad_transpose_cast(wsig),
        "eps_in": params["weight_eps_in"].astype(jnp.float32),
        "eps_out_row": eps_out_row,
        "bias_mu": params["bias_mu"].astype(jnp.float32),
        "bias_sigma": params["bias_sigma"].astype(jnp.float32),
        "bias_epsilon": params["bias_epsilon"].astype(jnp.float32),
    }


# ----------------------------------------------------------------------------
# Forward
# ----------------------------------------------------------------------------
def noisy_linear_forward(x, prep, training=True):
    """x: (B, input_dim) -> (B, output_dim), using prepared params (see prepare_noisy_linear)."""
    in_dim, out_dim = prep["in_dim"], prep["out_dim"]
    in_p, out_p = prep["in_p"], prep["out_p"]
    sdtype = prep["stream_dtype"]
    out_dtype = x.dtype

    B = x.shape[0]
    B_p = _round_up(B, 8)
    TB = _pick_batch_tile(B_p, 256)            # batch tile
    TK = _pick_tile(in_p, 2048)                # reduction tile (in_dim)
    TN = _pick_tile(out_p, 512)                # output tile (out_dim)
    # v7x megacore: make sure the "parallel" output axis has >= 2 tiles when possible.
    if out_p >= 256 and out_p // TN < 2:
        TN = _pick_tile(out_p, out_p // 2)
    grid = (B_p // TB, out_p // TN, in_p // TK)

    # Per-call work: only x and the tiny bias / eps vectors are padded here.
    x_p = _pad2(x, B_p, in_p).astype(sdtype)
    if training:
        bias = prep["bias_mu"] + prep["bias_sigma"] * prep["bias_epsilon"]   # f32, exact
    else:
        bias = prep["bias_mu"]
    bias_p = _pad2(bias.reshape(1, out_dim), 1, out_p).astype(jnp.float32)

    x_spec = pl.BlockSpec((TB, TK), lambda b, i, k: (b, k))
    w_spec = pl.BlockSpec((TK, TN), lambda b, i, k: (k, i))
    row_spec = pl.BlockSpec((1, TN), lambda b, i, k: (0, i))
    o_spec = pl.BlockSpec((TB, TN), lambda b, i, k: (b, i))

    # Scoped-VMEM budget sized from the actual double-buffered tile footprint.
    sb = jnp.dtype(sdtype).itemsize
    ob = jnp.dtype(out_dtype).itemsize
    n_streams = 2 if training else 1
    est = (n_streams * 2 * TB * TK * sb        # x (+ x*eps_in) double-buffered
           + n_streams * 2 * TK * TN * sb      # weight stream(s) double-buffered
           + (2 if training else 1) * 2 * TN * 4
           + 2 * TB * TN * ob                  # output
           + n_streams * TB * TN * 4)          # f32 accumulator(s)
    vmem_limit = min(max(int(est * 1.5), 32 * 1024 * 1024), 56 * 1024 * 1024)

    compiler_params = pltpu.CompilerParams(
        dimension_semantics=("parallel", "parallel", "arbitrary"),
        vmem_limit_bytes=vmem_limit)
    out_shape = jax.ShapeDtypeStruct((B_p, out_p), out_dtype)

    if training:
        # Factorised noise applied to the activations in f32, then cast for streaming.
        xn_p = _pad2(x * prep["eps_in"].reshape(1, in_dim), B_p, in_p).astype(sdtype)
        y_p = pl.pallas_call(
            _noisy_linear_train_kernel,
            out_shape=out_shape,
            grid_spec=pltpu.PrefetchScalarGridSpec(
                num_scalar_prefetch=0,
                grid=grid,
                in_specs=[x_spec, x_spec, w_spec, w_spec, row_spec, row_spec],
                out_specs=o_spec,
                scratch_shapes=[pltpu.VMEM((TB, TN), jnp.float32),
                                pltpu.VMEM((TB, TN), jnp.float32)]),
            compiler_params=compiler_params,
        )(x_p, xn_p, prep["wmu_t"], prep["wsig_t"], prep["eps_out_row"], bias_p)
    else:
        y_p = pl.pallas_call(
            _noisy_linear_eval_kernel,
            out_shape=out_shape,
            grid_spec=pltpu.PrefetchScalarGridSpec(
                num_scalar_prefetch=0,
                grid=grid,
                in_specs=[x_spec, w_spec, row_spec],
                out_specs=o_spec,
                scratch_shapes=[pltpu.VMEM((TB, TN), jnp.float32)]),
            compiler_params=compiler_params,
        )(x_p, prep["wmu_t"], bias_p)

    return y_p[:B, :out_dim]


# ----------------------------------------------------------------------------
# Deterministic parameter / noise initialization (mirrors reset_parameter and
# reset_noise from the PyTorch module, using jax.random for determinism).
# Noise is kept factorised (eps_out, eps_in); the dense outer product is also
# stored for the pure-JAX reference check.
# ----------------------------------------------------------------------------
def _scale_noise(key, size):
    noise = jax.random.normal(key, (size,), dtype=jnp.float32)
    return jnp.sign(noise) * jnp.sqrt(jnp.abs(noise))


def init_noisy_linear(key, input_dim, output_dim, std_init=0.5):
    k_wmu, k_bmu, k_ein, k_eout, k_beps = jax.random.split(key, 5)
    mu_range = 1.0 / jnp.sqrt(jnp.float32(input_dim))
    sigma_val = std_init / jnp.sqrt(jnp.float32(input_dim))

    weight_mu = jax.random.uniform(
        k_wmu, (output_dim, input_dim), jnp.float32, -mu_range, mu_range)
    bias_mu = jax.random.uniform(
        k_bmu, (output_dim,), jnp.float32, -mu_range, mu_range)
    weight_sigma = jnp.full((output_dim, input_dim), sigma_val, jnp.float32)
    bias_sigma = jnp.full((output_dim,), sigma_val, jnp.float32)

    eps_in = _scale_noise(k_ein, input_dim)
    eps_out = _scale_noise(k_eout, output_dim)
    weight_epsilon = jnp.outer(eps_out, eps_in)          # ger(eps_out, eps_in)
    bias_epsilon = _scale_noise(k_beps, output_dim)

    return {
        "weight_mu": weight_mu,
        "weight_sigma": weight_sigma,
        "weight_eps_out": eps_out,         # factorised noise used by the kernel
        "weight_eps_in": eps_in,
        "weight_epsilon": weight_epsilon,  # dense, reference-only
        "bias_mu": bias_mu,
        "bias_sigma": bias_sigma,
        "bias_epsilon": bias_epsilon,
    }


def _reference_forward(x, params, training=True):
    if training:
        w = params["weight_mu"] + params["weight_sigma"] * params["weight_epsilon"]
        b = params["bias_mu"] + params["bias_sigma"] * params["bias_epsilon"]
    else:
        w = params["weight_mu"]
        b = params["bias_mu"]
    return x @ w.T + b


if __name__ == "__main__":
    key = jax.random.PRNGKey(0)
    k_params, k_x = jax.random.split(key)

    batch, input_dim, output_dim = 2, 32, 64
    params = init_noisy_linear(k_params, input_dim, output_dim, std_init=0.5)
    x = jax.random.normal(k_x, (batch, input_dim), dtype=jnp.float32)

    ref_train = _reference_forward(x, params, training=True)
    ref_eval = _reference_forward(x, params, training=False)

    # Default bf16 weight-streaming path (f32 MXU accumulation).
    prep_bf16 = prepare_noisy_linear(params, stream_dtype=jnp.bfloat16)
    y_train = jax.block_until_ready(noisy_linear_forward(x, prep_bf16, training=True))
    y_eval = jax.block_until_ready(noisy_linear_forward(x, prep_bf16, training=False))

    # f32 streaming path for a tight numerical check against the f32 reference.
    prep_f32 = prepare_noisy_linear(params, stream_dtype=jnp.float32)
    y_train32 = jax.block_until_ready(noisy_linear_forward(x, prep_f32, training=True))
    y_eval32 = jax.block_until_ready(noisy_linear_forward(x, prep_f32, training=False))

    assert y_train.shape == (batch, output_dim)
    assert y_eval.shape == (batch, output_dim)
    assert jnp.allclose(y_train32, ref_train, atol=1e-4, rtol=1e-4)
    assert jnp.allclose(y_eval32, ref_eval, atol=1e-4, rtol=1e-4)
    # bf16 streaming: operands rounded to bf16, accumulation in f32.
    assert jnp.allclose(y_train, ref_train, atol=5e-2, rtol=5e-2)
    assert jnp.allclose(y_eval, ref_eval, atol=5e-2, rtol=5e-2)

    print("KERNEL_OK")
</pallas_src>

<mosaic_0001>
module attributes {stable_mosaic.version = 11 : i64} {
  func.func @_noisy_linear_train_kernel(%arg0: i32, %arg1: i32, %arg2: i32, %arg3: memref<8x128xbf16, #tpu.memory_space<vmem>>, %arg4: memref<8x128xbf16, #tpu.memory_space<vmem>>, %arg5: memref<128x128xbf16, #tpu.memory_space<vmem>>, %arg6: memref<128x128xbf16, #tpu.memory_space<vmem>>, %arg7: memref<1x128xf32, #tpu.memory_space<vmem>>, %arg8: memref<1x128xf32, #tpu.memory_space<vmem>>, %arg9: memref<8x128xf32, #tpu.memory_space<vmem>>, %arg10: memref<8x128xf32, #tpu.memory_space<vmem>>, %arg11: memref<8x128xf32, #tpu.memory_space<vmem>>) attributes {dimension_semantics = [#tpu.dimension_semantics<parallel>, #tpu.dimension_semantics<parallel>, #tpu.dimension_semantics<arbitrary>], iteration_bounds = array<i64: 1, 1, 1>, scalar_prefetch = 0 : i64, scratch_operands = 2 : i64, tpu.core_type = #tpu.core_type<tc>, window_params = [{transform_indices = @transform_0, window_bounds = array<i64: 8, 128>}, {transform_indices = @transform_1, window_bounds = array<i64: 8, 128>}, {transform_indices = @transform_2, window_bounds = array<i64: 128, 128>}, {transform_indices = @transform_3, window_bounds = array<i64: 128, 128>}, {transform_indices = @transform_4, window_bounds = array<i64: 1, 128>}, {transform_indices = @transform_5, window_bounds = array<i64: 1, 128>}, {transform_indices = @transform_6, window_bounds = array<i64: 8, 128>}]} {
    %c0_i32 = arith.constant 0 : i32
    %0 = arith.cmpi eq, %arg2, %c0_i32 : i32
    %1 = arith.extui %0 : i1 to i32
    %c0_i32_0 = arith.constant 0 : i32
    %2 = arith.cmpi ne, %1, %c0_i32_0 : i32
    scf.if %2 {
      %cst_19 = arith.constant 0.000000e+00 : f32
      %18 = vector.broadcast %cst_19 : f32 to vector<8x128xf32>
      %c0_20 = arith.constant 0 : index
      %c0_21 = arith.constant 0 : index
      %19 = vector.load %arg10[%c0_20, %c0_21] : memref<8x128xf32, #tpu.memory_space<vmem>>, vector<8x128xf32>
      tpu.vector_store %arg10[%c0_20, %c0_21], %18 {strides = array<i32>} : memref<8x128xf32, #tpu.memory_space<vmem>>, vector<8x128xf32>,
      %cst_22 = arith.constant 0.000000e+00 : f32
      %20 = vector.broadcast %cst_22 : f32 to vector<8x128xf32>
      %c0_23 = arith.constant 0 : index
      %c0_24 = arith.constant 0 : index
      %21 = vector.load %arg11[%c0_23, %c0_24] : memref<8x128xf32, #tpu.memory_space<vmem>>, vector<8x128xf32>
      tpu.vector_store %arg11[%c0_23, %c0_24], %20 {strides = array<i32>} : memref<8x128xf32, #tpu.memory_space<vmem>>, vector<8x128xf32>,
    } else {
    }
    %c0 = arith.constant 0 : index
    %c0_1 = arith.constant 0 : index
    %3 = vector.load %arg10[%c0, %c0_1] : memref<8x128xf32, #tpu.memory_space<vmem>>, vector<8x128xf32>
    %c0_2 = arith.constant 0 : index
    %c0_3 = arith.constant 0 : index
    %4 = vector.load %arg3[%c0_2, %c0_3] : memref<8x128xbf16, #tpu.memory_space<vmem>>, vector<8x128xbf16>
    %c0_4 = arith.constant 0 : index
    %c0_5 = arith.constant 0 : index
    %5 = vector.load %arg5[%c0_4, %c0_5] : memref<128x128xbf16, #tpu.memory_space<vmem>>, vector<128x128xbf16>
    %cst = arith.constant dense<0.000000e+00> : vector<8x128xf32>
    %6 = tpu.matmul %4, %5, %cst {dimension_numbers = #tpu.dot_dimension_numbers<[1], [0], [0], [1], [0, 0, 1, 1], [], []>} : vector<8x128xbf16>, vector<128x128xbf16>, vector<8x128xf32> -> vector<8x128xf32>
    %7 = arith.addf %3, %6 : vector<8x128xf32>
    %c0_6 = arith.constant 0 : index
    %c0_7 = arith.constant 0 : index
    %8 = vector.load %arg10[%c0_6, %c0_7] : memref<8x128xf32, #tpu.memory_space<vmem>>, vector<8x128xf32>
    tpu.vector_store %arg10[%c0_6, %c0_7], %7 {strides = array<i32>} : memref<8x128xf32, #tpu.memory_space<vmem>>, vector<8x128xf32>,
    %c0_8 = arith.constant 0 : index
    %c0_9 = arith.constant 0 : index
    %9 = vector.load %arg11[%c0_8, %c0_9] : memref<8x128xf32, #tpu.memory_space<vmem>>, vector<8x128xf32>
    %c0_10 = arith.constant 0 : index
    %c0_11 = arith.constant 0 : index
    %10 = vector.load %arg4[%c0_10, %c0_11] : memref<8x128xbf16, #tpu.memory_space<vmem>>, vector<8x128xbf16>
    %c0_12 = arith.constant 0 : index
    %c0_13 = arith.constant 0 : index
    %11 = vector.load %arg6[%c0_12, %c0_13] : memref<128x128xbf16, #tpu.memory_space<vmem>>, vector<128x128xbf16>
    %cst_14 = arith.constant dense<0.000000e+00> : vector<8x128xf32>
    %12 = tpu.matmul %10, %11, %cst_14 {dimension_numbers = #tpu.dot_dimension_numbers<[1], [0], [0], [1], [0, 0, 1, 1], [], []>} : vector<8x128xbf16>, vector<128x128xbf16>, vector<8x128xf32> -> vector<8x128xf32>
    %13 = arith.addf %9, %12 : vector<8x128xf32>
    %c0_15 = arith.constant 0 : index
    %c0_16 = arith.constant 0 : index
    %14 = vector.load %arg11[%c0_15, %c0_16] : memref<8x128xf32, #tpu.memory_space<vmem>>, vector<8x128xf32>
    tpu.vector_store %arg11[%c0_15, %c0_16], %13 {strides = array<i32>} : memref<8x128xf32, #tpu.memory_space<vmem>>, vector<8x128xf32>,
    %c0_i32_17 = arith.constant 0 : i32
    %15 = arith.cmpi eq, %arg2, %c0_i32_17 : i32
    %16 = arith.extui %15 : i1 to i32
    %c0_i32_18 = arith.constant 0 : i32
    %17 = arith.cmpi ne, %16, %c0_i32_18 : i32
    scf.if %17 {
      %c0_19 = arith.constant 0 : index
      %c0_20 = arith.constant 0 : index
      %18 = vector.load %arg10[%c0_19, %c0_20] : memref<8x128xf32, #tpu.memory_space<vmem>>, vector<8x128xf32>
      %c0_21 = arith.constant 0 : index
      %c0_22 = arith.constant 0 : index
      %19 = vector.load %arg7[%c0_21, %c0_22] : memref<1x128xf32, #tpu.memory_space<vmem>>, vector<1x128xf32>
      %c0_23 = arith.constant 0 : index
      %c0_24 = arith.constant 0 : index
      %20 = vector.load %arg11[%c0_23, %c0_24] : memref<8x128xf32, #tpu.memory_space<vmem>>, vector<8x128xf32>
      %21 = vector.broadcast %19 : vector<1x128xf32> to vector<8x128xf32>
      %22 = arith.mulf %21, %20 : vector<8x128xf32>
      %23 = arith.addf %18, %22 : vector<8x128xf32>
      %c0_25 = arith.constant 0 : index
      %c0_26 = arith.constant 0 : index
      %24 = vector.load %arg8[%c0_25, %c0_26] : memref<1x128xf32, #tpu.memory_space<vmem>>, vector<1x128xf32>
      %25 = vector.broadcast %24 : vector<1x128xf32> to vector<8x128xf32>
      %26 = arith.addf %23, %25 : vector<8x128xf32>
      %c0_27 = arith.constant 0 : index
      %c0_28 = arith.constant 0 : index
      %27 = vector.load %arg9[%c0_27, %c0_28] : memref<8x128xf32, #tpu.memory_space<vmem>>, vector<8x128xf32>
      tpu.vector_store %arg9[%c0_27, %c0_28], %26 {strides = array<i32>} : memref<8x128xf32, #tpu.memory_space<vmem>>, vector<8x128xf32>,
    } else {
    }
    return
  }
  func.func @transform_0(%arg0: i32, %arg1: i32, %arg2: i32) -> (i32, i32) {
    %c0_i32 = arith.constant 0 : i32
    return %arg0, %arg2 : i32, i32
  }
  func.func @transform_1(%arg0: i32, %arg1: i32, %arg2: i32) -> (i32, i32) {
    %c0_i32 = arith.constant 0 : i32
    return %arg0, %arg2 : i32, i32
  }
  func.func @transform_2(%arg0: i32, %arg1: i32, %arg2: i32) -> (i32, i32) {
    %c0_i32 = arith.constant 0 : i32
    return %arg2, %arg1 : i32, i32
  }
  func.func @transform_3(%arg0: i32, %arg1: i32, %arg2: i32) -> (i32, i32) {
    %c0_i32 = arith.constant 0 : i32
    return %arg2, %arg1 : i32, i32
  }
  func.func @transform_4(%arg0: i32, %arg1: i32, %arg2: i32) -> (i32, i32) {
    %c0_i32 = arith.constant 0 : i32
    %c0_i32_0 = arith.constant 0 : i32
    return %c0_i32, %arg1 : i32, i32
  }
  func.func @transform_5(%arg0: i32, %arg1: i32, %arg2: i32) -> (i32, i32) {
    %c0_i32 = arith.constant 0 : i32
    %c0_i32_0 = arith.constant 0 : i32
    return %c0_i32, %arg1 : i32, i32
  }
  func.func @transform_6(%arg0: i32, %arg1: i32, %arg2: i32) -> (i32, i32) {
    %c0_i32 = arith.constant 0 : i32
    return %arg0, %arg1 : i32, i32
  }
}

</mosaic_0001>

<llo_original>
// kernel: tpu_custom_call.1
$region0: #{tpu_custom_call.1}
  #allocation0 [shape = 'u32[]', space=smem, size = 0x4, offset = 0x4, fixed_abs, tag = 'smem constant byte address 0x4 - core index']
  #allocation1 [shape = 'u32[144,128]{1,0:T(1,128)}', space=vmem, size = 0x12000, scoped, tag = 'internal scratch']
  #allocation2 [shape = 'f32[8,128]{1,0:T(8,128)}', space=vmem, size = 0x1000, scoped, tag = 'scratch operand']
  #allocation3 [shape = 'f32[8,128]{1,0:T(8,128)}', space=vmem, size = 0x1000, scoped, tag = 'scratch operand']
  %s0 = inlined_call_operand.hbm [shape: bf16[8,128], index: 0, kind: input, shape index: {}]
  %s1 = inlined_call_operand.hbm [shape: bf16[8,128], index: 1, kind: input, shape index: {}]
  %s2 = inlined_call_operand.hbm [shape: bf16[128,128], index: 2, kind: input, shape index: {}]
  %s3 = inlined_call_operand.hbm [shape: bf16[128,128], index: 3, kind: input, shape index: {}]
  %s4 = inlined_call_operand.vmem [shape: f32[1,128], index: 4, kind: input, shape index: {}]
  %s5 = inlined_call_operand.vmem [shape: f32[1,128], index: 5, kind: input, shape index: {}]
  %s6 = inlined_call_operand.hbm [shape: f32[8,128], index: 6, kind: output, shape index: {}]
  %s7 = sld [smem:[#allocation0]]
  $region58: #{tpu_custom_call.1} parent=0
    _
  %s9 = ssub.s32 1, %s7
  %s10 = scalar_select 0, %s9, %s7
  $region1: #{tpu_custom_call.1} parent=0
    #allocation4 [shape = 'u8[2048]{0}', space=vmem, size = 0x800, scoped, tag = 'input window, operand 0, single buffered']
    #allocation5 [shape = 's32[1]{0}', space=sflag, size = 0x4, scoped, tag = 'scoped memory for tpu_custom_call.1']
    #allocation6 [shape = 's32[1]{0}', space=sflag, size = 0x4, scoped, tag = 'scoped memory for tpu_custom_call.1']
    #allocation7 [shape = 'u8[2048]{0}', space=vmem, size = 0x800, scoped, tag = 'input window, operand 1, single buffered']
    #allocation8 [shape = 's32[1]{0}', space=sflag, size = 0x4, scoped, tag = 'scoped memory for tpu_custom_call.1']
    #allocation9 [shape = 'u8[32768]{0}', space=vmem, size = 0x8000, scoped, tag = 'input window, operand 2, single buffered']
    #allocation10 [shape = 'u8[32768]{0}', space=vmem, size = 0x8000, scoped, tag = 'input window, operand 3, single buffered']
    #allocation11 [shape = 's32[1]{0}', space=sflag, size = 0x4, scoped, tag = 'scoped memory for tpu_custom_call.1']
    #allocation12 [shape = 'u8[4096]{0}', space=vmem, size = 0x1000, scoped, tag = 'output window, operand 0, single buffered']
    %11 = vsyncpa [#allocation5], 0
    %12 = vsyncpa [#allocation8], 0
    %13 = vsyncpa [#allocation11], 0
    %14 = vsyncpa [#allocation6], 0
    // Predicated region
    $region2: #{tpu_custom_call.1} parent=1 // pred_check
      _
    $region3: #{tpu_custom_call.1} parent=1 // pred_check_branch
      %16 = sbr.rel (0) target = $region5
    $region4: #{tpu_custom_call.1} parent=1 // pred_region
      %s18 = ssub.s32 64, 64
      %19 = vsyncadd [#allocation5], %s18
      %s21 = sshll.u32 [#allocation4], 4
      %s22 = int_to_ptr.vmem [resolvable:$true] %s21
      %24 = dma.hbm_to_vmem [thread:$0]  %s0, 64, %s22, [#allocation5]
    $region5: #{tpu_custom_call.1} parent=1 // pred_fallthru
      _
    // Predicated region
    $region6: #{tpu_custom_call.1} parent=1 // pred_check
      _
    $region7: #{tpu_custom_call.1} parent=1 // pred_check_branch
      %26 = sbr.rel (0) target = $region9
    $region8: #{tpu_custom_call.1} parent=1 // pred_region
      %s28 = ssub.s32 64, 64
      %29 = vsyncadd [#allocation8], %s28
      %s31 = sshll.u32 [#allocation7], 4
      %s32 = int_to_ptr.vmem [resolvable:$true] %s31
      %34 = dma.hbm_to_vmem [thread:$0]  %s1, 64, %s32, [#allocation8]
    $region9: #{tpu_custom_call.1} parent=1 // pred_fallthru
      _
    // Predicated region
    $region10: #{tpu_custom_call.1} parent=1 // pred_check
      _
    $region11: #{tpu_custom_call.1} parent=1 // pred_check_branch
      %36 = sbr.rel (0) target = $region13
    $region12: #{tpu_custom_call.1} parent=1 // pred_region
      %s38 = ssub.s32 1024, 1024
      %39 = vsyncadd [#allocation8], %s38
      %s40 = sshll.u32 [#allocation9], 4
      %s41 = int_to_ptr.vmem [resolvable:$true] %s40
      %46 = dma.hbm_to_vmem [thread:$0]  %s2, 1024, %s41, [#allocation8], 64, 64, 4
    $region13: #{tpu_custom_call.1} parent=1 // pred_fallthru
      _
    // Predicated region
    $region14: #{tpu_custom_call.1} parent=1 // pred_check
      _
    $region15: #{tpu_custom_call.1} parent=1 // pred_check_branch
      %48 = sbr.rel (0) target = $region17
    $region16: #{tpu_custom_call.1} parent=1 // pred_region
      %s50 = ssub.s32 1024, 1024
      %51 = vsyncadd [#allocation11], %s50
      %s52 = sshll.u32 [#allocation10], 4
      %s53 = int_to_ptr.vmem [resolvable:$true] %s52
      %58 = dma.hbm_to_vmem [thread:$0]  %s3, 1024, %s53, [#allocation11], 64, 64, 4
    $region17: #{tpu_custom_call.1} parent=1 // pred_fallthru
      _
    // Predicated region
    $region18: #{tpu_custom_call.1} parent=1 // pred_check
      _
    $region19: #{tpu_custom_call.1} parent=1 // pred_check_branch
      %60 = sbr.rel (0) target = $region21
    $region20: #{tpu_custom_call.1} parent=1 // pred_region
      _
    $region21: #{tpu_custom_call.1} parent=1 // pred_fallthru
      _
    // Predicated region
    $region22: #{tpu_custom_call.1} parent=1 // pred_check
      _
    $region23: #{tpu_custom_call.1} parent=1 // pred_check_branch
      %62 = sbr.rel (0) target = $region25
    $region24: #{tpu_custom_call.1} parent=1 // pred_region
      _
    $region25: #{tpu_custom_call.1} parent=1 // pred_fallthru
      _
    // Predicated region
    $region26: #{tpu_custom_call.1} parent=1 // pred_check
      _
    $region27: #{tpu_custom_call.1} parent=1 // pred_check_branch
      %64 = sbr.rel (0) target = $region29
    $region28: #{tpu_custom_call.1} parent=1 // pred_region
      %65 = dma.done [#allocation5], 64
    $region29: #{tpu_custom_call.1} parent=1 // pred_fallthru
      _
    // Predicated region
    $region30: #{tpu_custom_call.1} parent=1 // pred_check
      _
    $region31: #{tpu_custom_call.1} parent=1 // pred_check_branch
      %67 = sbr.rel (0) target = $region33
    $region32: #{tpu_custom_call.1} parent=1 // pred_region
      %68 = dma.done [#allocation8], 64
    $region33: #{tpu_custom_call.1} parent=1 // pred_fallthru
      _
    // Predicated region
    $region34: #{tpu_custom_call.1} parent=1 // pred_check
      _
    $region35: #{tpu_custom_call.1} parent=1 // pred_check_branch
      %70 = sbr.rel (0) target = $region37
    $region36: #{tpu_custom_call.1} parent=1 // pred_region
      %71 = dma.done [#allocation8], 1024
    $region37: #{tpu_custom_call.1} parent=1 // pred_fallthru
      _
    // Predicated region
    $region38: #{tpu_custom_call.1} parent=1 // pred_check
      _
    $region39: #{tpu_custom_call.1} parent=1 // pred_check_branch
      %73 = sbr.rel (0) target = $region41
    $region40: #{tpu_custom_call.1} parent=1 // pred_region
      %74 = dma.done [#allocation11], 1024
    $region41: #{tpu_custom_call.1} parent=1 // pred_fallthru
      _
    %p76 = scmp.eq.s32.totalorder 0, 0
    // Predicated region
    $region42: #{tpu_custom_call.1} parent=1 // pred_check
      %p77 = pneg %p76
    $region43: #{tpu_custom_call.1} parent=1 // pred_check_branch
      %79 = sbr.rel (%p77) target = $region45
    $region44: #{tpu_custom_call.1} parent=1 // pred_region
      %80 = vst [vmem:[#allocation2] sm:$0xff] 0.0
      %81 = vst [vmem:[#allocation3] sm:$0xff] 0.0
    $region45: #{tpu_custom_call.1} parent=1 // pred_fallthru
      _
    %v82 = vld [vmem:[#allocation2] sm:$0xff]
    %v83 = vld [vmem:[#allocation4] sm:$0xf]
    %v84 = vld [vmem:[#allocation9] sm:$0xf]
    %v85 = vld [vmem:[#allocation9 + $0x4] sm:$0xf]
    %v86 = vld [vmem:[#allocation9 + $0x8] sm:$0xf]
    %v87 = vld [vmem:[#allocation9 + $0xc] sm:$0xf]
    %v88 = vld [vmem:[#allocation9 + $0x10] sm:$0xf]
    %v89 = vld [vmem:[#allocation9 + $0x14] sm:$0xf]
    %v90 = vld [vmem:[#allocation9 + $0x18] sm:$0xf]
    %v91 = vld [vmem:[#allocation9 + $0x1c] sm:$0xf]
    %v92 = vld [vmem:[#allocation9 + $0x20] sm:$0xf]
    %v93 = vld [vmem:[#allocation9 + $0x24] sm:$0xf]
    %v94 = vld [vmem:[#allocation9 + $0x28] sm:$0xf]
    %v95 = vld [vmem:[#allocation9 + $0x2c] sm:$0xf]
    %v96 = vld [vmem:[#allocation9 + $0x30] sm:$0xf]
    %v97 = vld [vmem:[#allocation9 + $0x34] sm:$0xf]
    %v98 = vld [vmem:[#allocation9 + $0x38] sm:$0xf]
    %v99 = vld [vmem:[#allocation9 + $0x3c] sm:$0xf]
    %v116 = vunpack.c.l.b16 %v84
    %v117 = vunpack.c.l.b16 %v85
    %v118 = vunpack.c.l.b16 %v86
    %v119 = vunpack.c.l.b16 %v87
    %v120 = vunpack.c.l.b16 %v88
    %v121 = vunpack.c.l.b16 %v89
    %v122 = vunpack.c.l.b16 %v90
    %v123 = vunpack.c.l.b16 %v91
    %v124 = vunpack.c.l.b16 %v92
    %v125 = vunpack.c.l.b16 %v93
    %v126 = vunpack.c.l.b16 %v94
    %v127 = vunpack.c.l.b16 %v95
    %v128 = vunpack.c.l.b16 %v96
    %v129 = vunpack.c.l.b16 %v97
    %v130 = vunpack.c.l.b16 %v98
    %v131 = vunpack.c.l.b16 %v99
    %v132 = vpack.c.b16 %v117, %v116
    %v133 = vpack.c.b16 %v119, %v118
    %v134 = vpack.c.b16 %v121, %v120
    %v135 = vpack.c.b16 %v123, %v122
    %v136 = vpack.c.b16 %v125, %v124
    %v137 = vpack.c.b16 %v127, %v126
    %v138 = vpack.c.b16 %v129, %v128
    %v139 = vpack.c.b16 %v131, %v130
    %148 = vmatprep.subr.bf16.mxu0 0
    %149 = vmatpush1.bf16.msra.mxu0 %v132
    %150 = vmatprep.subr.bf16.mxu0 0
    %151 = vmatpush1.bf16.msra.mxu0 %v133
    %152 = vmatprep.subr.bf16.mxu0 0
    %153 = vmatpush1.bf16.msra.mxu0 %v134
    %154 = vmatprep.subr.bf16.mxu0 0
    %155 = vmatpush1.bf16.msra.mxu0 %v135
    %156 = vmatprep.subr.bf16.mxu0 0
    %157 = vmatpush1.bf16.msra.mxu0 %v136
    %158 = vmatprep.subr.bf16.mxu0 0
    %159 = vmatpush1.bf16.msra.mxu0 %v137
    %160 = vmatprep.subr.bf16.mxu0 0
    %161 = vmatpush1.bf16.msra.mxu0 %v138
    %162 = vmatprep.subr.bf16.mxu0 0
    %163 = vmatpush1.bf16.msra.mxu0 %v139
    %164 = vmatprep.subr.bf16.mxu0 0
    %165 = vmatpush1.bf16.msra.mxu0 0
    %166 = vmatprep.subr.bf16.mxu0 0
    %167 = vmatpush1.bf16.msra.mxu0 0
    %168 = vmatprep.subr.bf16.mxu0 0
    %169 = vmatpush1.bf16.msra.mxu0 0
    %170 = vmatprep.subr.bf16.mxu0 0
    %171 = vmatpush1.bf16.msra.mxu0 0
    %172 = vmatprep.subr.bf16.mxu0 0
    %173 = vmatpush1.bf16.msra.mxu0 0
    %174 = vmatprep.subr.bf16.mxu0 0
    %175 = vmatpush1.bf16.msra.mxu0 0
    %176 = vmatprep.subr.bf16.mxu0 0
    %177 = vmatpush1.bf16.msra.mxu0 0
    %178 = vmatprep.subr.bf16.mxu0 0
    %179 = vmatpush1.bf16.msra.mxu0 0
    %180 = vmatprep.mubr.bf16.mxu0 0
    %181 = vmatmul.mubr.bf16.gmra.mrb[0].mxu0 %v83
    %v182 = vpop.f32.mrb[0].mxu0
    %v183 = vadd.f32 0.0, %v182
    %v184 = vpop.f32.mrb[0].mxu0
    %v185 = vpop.f32.mrb[0].mxu0
    %v186 = vpop.f32.mrb[0].mxu0
    %187 = vdwg.mxu0
    %v188 = vadd.f32 %v82, %v183
    %189 = vst [vmem:[#allocation2] sm:$0xff] %v188
    %v190 = vld [vmem:[#allocation3] sm:$0xff]
    %v191 = vld [vmem:[#allocation7] sm:$0xf]
    %v192 = vld [vmem:[#allocation10] sm:$0xf]
    %v193 = vld [vmem:[#allocation10 + $0x4] sm:$0xf]
    %v194 = vld [vmem:[#allocation10 + $0x8] sm:$0xf]
    %v195 = vld [vmem:[#allocation10 + $0xc] sm:$0xf]
    %v196 = vld [vmem:[#allocation10 + $0x10] sm:$0xf]
    %v197 = vld [vmem:[#allocation10 + $0x14] sm:$0xf]
    %v198 = vld [vmem:[#allocation10 + $0x18] sm:$0xf]
    %v199 = vld [vmem:[#allocation10 + $0x1c] sm:$0xf]
    %v200 = vld [vmem:[#allocation10 + $0x20] sm:$0xf]
    %v201 = vld [vmem:[#allocation10 + $0x24] sm:$0xf]
    %v202 = vld [vmem:[#allocation10 + $0x28] sm:$0xf]
    %v203 = vld [vmem:[#allocation10 + $0x2c] sm:$0xf]
    %v204 = vld [vmem:[#allocation10 + $0x30] sm:$0xf]
    %v205 = vld [vmem:[#allocation10 + $0x34] sm:$0xf]
    %v206 = vld [vmem:[#allocation10 + $0x38] sm:$0xf]
    %v207 = vld [vmem:[#allocation10 + $0x3c] sm:$0xf]
    %v224 = vunpack.c.l.b16 %v192
    %v225 = vunpack.c.l.b16 %v193
    %v226 = vunpack.c.l.b16 %v194
    %v227 = vunpack.c.l.b16 %v195
    %v228 = vunpack.c.l.b16 %v196
    %v229 = vunpack.c.l.b16 %v197
    %v230 = vunpack.c.l.b16 %v198
    %v231 = vunpack.c.l.b16 %v199
    %v232 = vunpack.c.l.b16 %v200
    %v233 = vunpack.c.l.b16 %v201
    %v234 = vunpack.c.l.b16 %v202
    %v235 = vunpack.c.l.b16 %v203
    %v236 = vunpack.c.l.b16 %v204
    %v237 = vunpack.c.l.b16 %v205
    %v238 = vunpack.c.l.b16 %v206
    %v239 = vunpack.c.l.b16 %v207
    %v240 = vpack.c.b16 %v225, %v224
    %v241 = vpack.c.b16 %v227, %v226
    %v242 = vpack.c.b16 %v229, %v228
    %v243 = vpack.c.b16 %v231, %v230
    %v244 = vpack.c.b16 %v233, %v232
    %v245 = vpack.c.b16 %v235, %v234
    %v246 = vpack.c.b16 %v237, %v236
    %v247 = vpack.c.b16 %v239, %v238
    %256 = vmatprep.subr.bf16.mxu0 0
    %257 = vmatpush1.bf16.msra.mxu0 %v240
    %258 = vmatprep.subr.bf16.mxu0 0
    %259 = vmatpush1.bf16.msra.mxu0 %v241
    %260 = vmatprep.subr.bf16.mxu0 0
    %261 = vmatpush1.bf16.msra.mxu0 %v242
    %262 = vmatprep.subr.bf16.mxu0 0
    %263 = vmatpush1.bf16.msra.mxu0 %v243
    %264 = vmatprep.subr.bf16.mxu0 0
    %265 = vmatpush1.bf16.msra.mxu0 %v244
    %266 = vmatprep.subr.bf16.mxu0 0
    %267 = vmatpush1.bf16.msra.mxu0 %v245
    %268 = vmatprep.subr.bf16.mxu0 0
    %269 = vmatpush1.bf16.msra.mxu0 %v246
    %270 = vmatprep.subr.bf16.mxu0 0
    %271 = vmatpush1.bf16.msra.mxu0 %v247
    %272 = vmatprep.subr.bf16.mxu0 0
    %273 = vmatpush1.bf16.msra.mxu0 0
    %274 = vmatprep.subr.bf16.mxu0 0
    %275 = vmatpush1.bf16.msra.mxu0 0
    %276 = vmatprep.subr.bf16.mxu0 0
    %277 = vmatpush1.bf16.msra.mxu0 0
    %278 = vmatprep.subr.bf16.mxu0 0
    %279 = vmatpush1.bf16.msra.mxu0 0
    %280 = vmatprep.subr.bf16.mxu0 0
    %281 = vmatpush1.bf16.msra.mxu0 0
    %282 = vmatprep.subr.bf16.mxu0 0
    %283 = vmatpush1.bf16.msra.mxu0 0
    %284 = vmatprep.subr.bf16.mxu0 0
    %285 = vmatpush1.bf16.msra.mxu0 0
    %286 = vmatprep.subr.bf16.mxu0 0
    %287 = vmatpush1.bf16.msra.mxu0 0
    %288 = vmatprep.mubr.bf16.mxu0 0
    %289 = vmatmul.mubr.bf16.gmra.mrb[0].mxu0 %v191
    %v290 = vpop.f32.mrb[0].mxu0
    %v291 = vadd.f32 0.0, %v290
    %v292 = vpop.f32.mrb[0].mxu0
    %v293 = vpop.f32.mrb[0].mxu0
    %v294 = vpop.f32.mrb[0].mxu0
    %295 = vdwg.mxu0
    %v296 = vadd.f32 %v190, %v291
    %297 = vst [vmem:[#allocation3] sm:$0xff] %v296
    // Predicated region
    $region46: #{tpu_custom_call.1} parent=1 // pred_check
      %p298 = pneg %p76
    $region47: #{tpu_custom_call.1} parent=1 // pred_check_branch
      %300 = sbr.rel (%p298) target = $region49
    $region48: #{tpu_custom_call.1} parent=1 // pred_region
      %v301 = vld [vmem:[#allocation2] sm:$0xff]
      %v302 = vld [vmem:[%s4] sm:$0x1]
      %v303 = vld [vmem:[#allocation3] sm:$0xff]
      %v305 = vlaneseq
      %v306 = vshrl.u32 %v305, 7
      %v307 = vsub.s32 0, %v306
      %v308 = vrot.slane %v302, %v307
      %v310 = vmul.f32 %v308, %v303
      %v311 = vadd.f32 %v301, %v310
      %v312 = vld [vmem:[%s5] sm:$0x1]
      %v314 = vlaneseq
      %v315 = vshrl.u32 %v314, 7
      %v316 = vsub.s32 0, %v315
      %v317 = vrot.slane %v312, %v316
      %v319 = vadd.f32 %v311, %v317
      %320 = vst [vmem:[#allocation12] sm:$0xff] %v319
    $region49: #{tpu_custom_call.1} parent=1 // pred_fallthru
      _
    // Predicated region
    $region50: #{tpu_custom_call.1} parent=1 // pred_check
      _
    $region51: #{tpu_custom_call.1} parent=1 // pred_check_branch
      %322 = sbr.rel (0) target = $region53
    $region52: #{tpu_custom_call.1} parent=1 // pred_region
      %s324 = ssub.s32 128, 128
      %325 = vsyncadd [#allocation6], %s324
      %s327 = sshll.u32 [#allocation12], 4
      %s328 = int_to_ptr.vmem [resolvable:$true] %s327
      %330 = dma.vmem_to_hbm [thread:$0]  %s328, 128, %s6, [#allocation6]
    $region53: #{tpu_custom_call.1} parent=1 // pred_fallthru
      _
    // Predicated region
    $region54: #{tpu_custom_call.1} parent=1 // pred_check
      _
    $region55: #{tpu_custom_call.1} parent=1 // pred_check_branch
      %332 = sbr.rel (0) target = $region57
    $region56: #{tpu_custom_call.1} parent=1 // pred_region
      %333 = dma.done [#allocation6], 128
    $region57: #{tpu_custom_call.1} parent=1 // pred_fallthru
      _
    %334 = vsyncpa [#allocation5], 1
    %335 = vsyncpa [#allocation8], 1
    %336 = vsyncpa [#allocation11], 1
    %337 = vsyncpa [#allocation6], 1

</llo_original>
